<compile_context>
chip_gen: v7x
topology: tpu7x:2x2x1
jax: 0.10.0
libtpu: 0.0.40
codegen_flags: <defaults>
</compile_context>

<pallas_src>
import functools

import jax
import jax.numpy as jnp
from jax.experimental import pallas as pl
from jax.experimental.pallas import tpu as pltpu

# ----------------------------- model dimensions -----------------------------
M_MODELS = 3      # ensemble size (module asserts > 1)
F = 32            # atomic feature width
H = 32            # head MLP hidden width
O = 8             # head outputs: [ea, qa, ea_rep, ea_ele, ea_vdw, pa, c6, pad]
K = 16            # radial basis functions
NUM_ELEM = 20     # nuclear embedding table size
RCUT = 5.0
LANE = 128        # TPU lane width; everything is padded to this on the last dim

# output-slab column layout (lane-dense, 128 wide)
_COL_FMEAN = 0                       # feat mean              [0, 32)
_COL_FSTD = F                        # feat std               [32, 64)
_COL_OMEAN = 2 * F                   # head-output mean       [64, 72)
_COL_OSTD = 2 * F + O                # head-output std        [72, 80)
_COL_ESUM = 2 * F + 2 * O            # per-model esum         [80, 83)
_COL_QA = _COL_ESUM + M_MODELS       # per-model (raw) qa     [83, 86)
_COLS_USED = _COL_QA + M_MODELS
assert _COLS_USED <= LANE
assert M_MODELS * F <= LANE and M_MODELS * H <= LANE and M_MODELS * O <= LANE


def _round_up(x, m):
    return ((x + m - 1) // m) * m


# ----------------------------- fused Pallas kernel ---------------------------
def _fused_head_kernel(x_ref, w1_ref, b1_ref, w2_ref, b2_ref, o_ref):
    """Per atom-tile: block-diag head MLP for all models + ensemble mean/std.

    x_ref : (TN, 128) f32, cols [m*F, (m+1)*F) hold model m's atomic features.
    w1/w2 : (128, 128) block-diagonal packed weights; b1/b2 : (1, 128).
    o_ref : (TN, 128) f32 output slab (see column layout above).
    """
    x = x_ref[...]                                             # (TN, 128) f32

    # one MXU matmul per layer covers all M models (bf16 operands, f32 acc)
    h = jnp.dot(x.astype(jnp.bfloat16), w1_ref[...].astype(jnp.bfloat16),
                preferred_element_type=jnp.float32) + b1_ref[...]
    h = h * jax.nn.sigmoid(h)                                  # SiLU in f32
    y = jnp.dot(h.astype(jnp.bfloat16), w2_ref[...].astype(jnp.bfloat16),
                preferred_element_type=jnp.float32) + b2_ref[...]

    feats = [x[:, m * F:(m + 1) * F] for m in range(M_MODELS)]   # M x (TN, F)
    outs = [y[:, m * O:(m + 1) * O] for m in range(M_MODELS)]    # M x (TN, O)

    inv_m = 1.0 / M_MODELS
    inv_m1 = 1.0 / (M_MODELS - 1)

    f_sum = feats[0]
    o_sum = outs[0]
    for m in range(1, M_MODELS):
        f_sum = f_sum + feats[m]
        o_sum = o_sum + outs[m]
    f_mean = f_sum * inv_m
    o_mean = o_sum * inv_m

    f_var = (feats[0] - f_mean) ** 2
    o_var = (outs[0] - o_mean) ** 2
    for m in range(1, M_MODELS):
        f_var = f_var + (feats[m] - f_mean) ** 2
        o_var = o_var + (outs[m] - o_mean) ** 2
    f_std = jnp.sqrt(f_var * inv_m1)          # ddof=1, like torch.std
    o_std = jnp.sqrt(o_var * inv_m1)

    # per-model energy sum (ea + ea_rep + ea_ele + ea_vdw) and raw qa, one lane each
    eq_cols = []
    for m in range(M_MODELS):
        om = outs[m]
        eq_cols.append(om[:, 0:1] + om[:, 2:3] + om[:, 3:4] + om[:, 4:5])
    for m in range(M_MODELS):
        eq_cols.append(outs[m][:, 1:2])
    eq = jnp.concatenate(eq_cols, axis=-1)    # (TN, 2*M)

    o_ref[...] = jnp.zeros_like(o_ref)
    o_ref[:, _COL_FMEAN:_COL_FMEAN + F] = f_mean
    o_ref[:, _COL_FSTD:_COL_FSTD + F] = f_std
    o_ref[:, _COL_OMEAN:_COL_OMEAN + O] = o_mean
    o_ref[:, _COL_OSTD:_COL_OSTD + O] = o_std
    o_ref[:, _COL_ESUM:_COL_ESUM + 2 * M_MODELS] = eq


def fused_head_ensemble(feat, w1, b1, w2, b2):
    """feat: (M, N, F) f32 -> slab (N, 128) of per-atom ensemble statistics."""
    M, N, Fd = feat.shape

    # lane-pack the ensemble axis: (N, M*F) padded to (N_pad, 128)
    fp = jnp.transpose(feat, (1, 0, 2)).reshape(N, M * Fd)
    tn = min(256, _round_up(N, 8))            # atom-tile size (sublane multiple)
    n_pad = _round_up(N, tn)
    fp = jnp.pad(fp, ((0, n_pad - N), (0, LANE - M * Fd)))

    # block-diagonal packed weights (tiny, built per call in XLA)
    w1_bd = jnp.zeros((LANE, LANE), jnp.float32)
    w2_bd = jnp.zeros((LANE, LANE), jnp.float32)
    b1_bd = jnp.zeros((1, LANE), jnp.float32)
    b2_bd = jnp.zeros((1, LANE), jnp.float32)
    for m in range(M):
        w1_bd = w1_bd.at[m * Fd:(m + 1) * Fd, m * H:(m + 1) * H].set(w1[m])
        w2_bd = w2_bd.at[m * H:(m + 1) * H, m * O:(m + 1) * O].set(w2[m])
        b1_bd = b1_bd.at[:, m * H:(m + 1) * H].set(b1[m])
        b2_bd = b2_bd.at[:, m * O:(m + 1) * O].set(b2[m])

    slab = pl.pallas_call(
        _fused_head_kernel,
        out_shape=jax.ShapeDtypeStruct((n_pad, LANE), jnp.float32),
        grid_spec=pltpu.PrefetchScalarGridSpec(
            num_scalar_prefetch=0,
            grid=(n_pad // tn,),
            in_specs=[
                pl.BlockSpec((tn, LANE), lambda i: (i, 0)),
                pl.BlockSpec((LANE, LANE), lambda i: (0, 0)),
                pl.BlockSpec((1, LANE), lambda i: (0, 0)),
                pl.BlockSpec((LANE, LANE), lambda i: (0, 0)),
                pl.BlockSpec((1, LANE), lambda i: (0, 0)),
            ],
            out_specs=pl.BlockSpec((tn, LANE), lambda i: (i, 0)),
        ),
        compiler_params=pltpu.CompilerParams(
            dimension_semantics=("parallel",)),
    )(fp, w1_bd, b1_bd, w2_bd, b2_bd)
    return slab[:N]


# ------------------------------- JAX glue -------------------------------------
def atomic_features(params, Z, Q, S, R, idx_i, idx_j, batch_seg):
    """Per-model nuclear/charge/spin embedding + one radial message-passing step.

    Returns feat: (M, N, F).  Gather / segment_sum are data-dependent scatter ops,
    so they stay in plain JAX/XLA.
    """
    embed = params["embed"]          # (M, NUM_ELEM, F)
    q_w = params["q_embed"]          # (M, F)
    s_w = params["s_embed"]          # (M, F)
    w_rbf = params["w_rbf"]          # (M, K, F)

    x = embed[:, Z, :]                                               # (M, N, F)
    x = x + Q[batch_seg][None, :, None] * q_w[:, None, :]
    x = x + S[batch_seg][None, :, None] * s_w[:, None, :]

    d = R[idx_j] - R[idx_i]                                          # (P, 3)
    rij = jnp.sqrt(jnp.sum(d * d, axis=-1) + 1e-12)                  # (P,)
    cut = jnp.where(rij < RCUT, 0.5 * (jnp.cos(jnp.pi * rij / RCUT) + 1.0), 0.0)
    mu = jnp.linspace(0.0, RCUT, K, dtype=jnp.float32)
    rbf = jnp.exp(-4.0 * (rij[:, None] - mu[None, :]) ** 2) * cut[:, None]  # (P, K)

    g = jnp.einsum("pk,mkf->mpf", rbf, w_rbf)                        # (M, P, F)
    msg = g * x[:, idx_j, :]                                         # (M, P, F)
    agg = jax.ops.segment_sum(jnp.moveaxis(msg, 0, 1), idx_i,
                              num_segments=Z.shape[0])               # (N, M, F)
    return x + jnp.moveaxis(agg, 0, 1)                               # (M, N, F)


@functools.partial(jax.jit, static_argnames=("num_batch", "use_dipole"))
def spookynet_ensemble_forward(params, Z, Q, S, R, idx_i, idx_j,
                               num_batch=1, batch_seg=None, use_dipole=True):
    """Mirrors SpookyNetEnsemble.forward: returns 11 (mean, std) tuples."""
    if batch_seg is None:
        batch_seg = jnp.zeros_like(Z)

    N = Z.shape[0]
    feat = atomic_features(params, Z, Q, S, R, idx_i, idx_j, batch_seg)  # (M, N, F)

    slab = fused_head_ensemble(feat, params["w1"], params["b1"],
                               params["w2"], params["b2"])               # (N, 128)

    f_mean = slab[:, _COL_FMEAN:_COL_FMEAN + F]
    f_std = slab[:, _COL_FSTD:_COL_FSTD + F]
    o_mean = slab[:, _COL_OMEAN:_COL_OMEAN + O]
    o_std = slab[:, _COL_OSTD:_COL_OSTD + O]
    esum_m = slab[:, _COL_ESUM:_COL_ESUM + M_MODELS].T                   # (M, N)
    qa_m = slab[:, _COL_QA:_COL_QA + M_MODELS].T                         # (M, N)

    # per-model total energy via index_add over batch_seg, then ensemble mean/std
    energy_m = jax.ops.segment_sum(esum_m.T, batch_seg,
                                   num_segments=num_batch).T             # (M, B)
    energy = (jnp.mean(energy_m, axis=0), jnp.std(energy_m, axis=0, ddof=1))

    # charge conservation per molecule, per model; ensemble mean/std of corrected qa
    qsum = jax.ops.segment_sum(qa_m.T, batch_seg, num_segments=num_batch)  # (B, M)
    counts = jax.ops.segment_sum(jnp.ones((N,), jnp.float32), batch_seg,
                                 num_segments=num_batch)                   # (B,)
    corr = (Q[:, None] - qsum) / counts[:, None]                           # (B, M)
    qa_corr = qa_m + corr.T[:, batch_seg]                                  # (M, N)
    qa = (jnp.mean(qa_corr, axis=0), jnp.std(qa_corr, axis=0, ddof=1))

    f = (f_mean, f_std)
    ea = (o_mean[:, 0], o_std[:, 0])
    ea_rep = (o_mean[:, 2], o_std[:, 2])
    ea_ele = (o_mean[:, 3], o_std[:, 3])
    ea_vdw = (o_mean[:, 4], o_std[:, 4])
    pa = (o_mean[:, 5], o_std[:, 5])
    c6 = (o_mean[:, 6], o_std[:, 6])

    # forces: zeros (see TODO(synk) at top of file -> use_forces=False path)
    forces = (jnp.zeros_like(R), jnp.zeros_like(R))

    if use_dipole:
        # matches the torch reference: index_add of qa_mean*R and |index_add of qa_std*R|
        dip_mean = jax.ops.segment_sum(qa[0][:, None] * R, batch_seg,
                                       num_segments=num_batch)
        dip_std = jax.ops.segment_sum(qa[1][:, None] * R, batch_seg,
                                      num_segments=num_batch)
        dipole = (dip_mean, jnp.abs(dip_std))
    else:
        dipole = (jnp.zeros((num_batch, 3), jnp.float32),
                  jnp.zeros((num_batch, 3), jnp.float32))

    return (energy, forces, dipole, f, ea, qa, ea_rep, ea_ele, ea_vdw, pa, c6)


# ------------------------------- params ---------------------------------------
def init_params(key):
    ks = jax.random.split(key, 8)

    def rn(k, shape, scale=0.1):
        return scale * jax.random.normal(k, shape, dtype=jnp.float32)

    return {
        "embed": rn(ks[0], (M_MODELS, NUM_ELEM, F)),
        "q_embed": rn(ks[1], (M_MODELS, F)),
        "s_embed": rn(ks[2], (M_MODELS, F)),
        "w_rbf": rn(ks[3], (M_MODELS, K, F)),
        "w1": rn(ks[4], (M_MODELS, F, H), scale=1.0 / (F ** 0.5)),
        "b1": rn(ks[5], (M_MODELS, 1, H), scale=0.01),
        "w2": rn(ks[6], (M_MODELS, H, O), scale=1.0 / (H ** 0.5)),
        "b2": rn(ks[7], (M_MODELS, 1, O), scale=0.01),
    }


# --------------------------------- main ----------------------------------------
if __name__ == "__main__":
    key = jax.random.PRNGKey(0)
    kp, kz, kr = jax.random.split(key, 3)

    params = init_params(kp)

    N = 8
    num_batch = 2
    Z = jax.random.randint(kz, (N,), 1, 10)                       # atomic numbers
    R = 2.0 * jax.random.normal(kr, (N, 3), dtype=jnp.float32)    # positions
    Q = jnp.array([0.0, 1.0], dtype=jnp.float32)                  # total charges
    S = jnp.array([0.0, 0.0], dtype=jnp.float32)                  # total spins
    batch_seg = jnp.array([0, 0, 0, 0, 1, 1, 1, 1], dtype=jnp.int32)

    # all intra-molecule pairs i != j
    ii, jj = [], []
    seg = [0, 0, 0, 0, 1, 1, 1, 1]
    for b in range(num_batch):
        atoms = [a for a in range(N) if seg[a] == b]
        for i in atoms:
            for j in atoms:
                if i != j:
                    ii.append(i)
                    jj.append(j)
    idx_i = jnp.array(ii, dtype=jnp.int32)
    idx_j = jnp.array(jj, dtype=jnp.int32)

    outs = spookynet_ensemble_forward(params, Z, Q, S, R, idx_i, idx_j,
                                      num_batch=num_batch, batch_seg=batch_seg)
    jax.block_until_ready(jax.tree_util.tree_leaves(outs))
    print("KERNEL_OK")
</pallas_src>

<mosaic_0001>
module attributes {stable_mosaic.version = 11 : i64} {
  func.func @_fused_head_kernel(%arg0: i32, %arg1: memref<8x128xf32, #tpu.memory_space<vmem>>, %arg2: memref<128x128xf32, #tpu.memory_space<vmem>>, %arg3: memref<1x128xf32, #tpu.memory_space<vmem>>, %arg4: memref<128x128xf32, #tpu.memory_space<vmem>>, %arg5: memref<1x128xf32, #tpu.memory_space<vmem>>, %arg6: memref<8x128xf32, #tpu.memory_space<vmem>>) attributes {dimension_semantics = [#tpu.dimension_semantics<parallel>], iteration_bounds = array<i64: 1>, scalar_prefetch = 0 : i64, scratch_operands = 0 : i64, tpu.core_type = #tpu.core_type<tc>, window_params = [{transform_indices = @transform_0, window_bounds = array<i64: 8, 128>}, {pipeline_mode = #tpu.pipeline_mode<synchronous>, transform_indices = @transform_1, window_bounds = array<i64: 128, 128>}, {pipeline_mode = #tpu.pipeline_mode<synchronous>, transform_indices = @transform_2, window_bounds = array<i64: 1, 128>}, {pipeline_mode = #tpu.pipeline_mode<synchronous>, transform_indices = @transform_3, window_bounds = array<i64: 128, 128>}, {pipeline_mode = #tpu.pipeline_mode<synchronous>, transform_indices = @transform_4, window_bounds = array<i64: 1, 128>}, {transform_indices = @transform_5, window_bounds = array<i64: 8, 128>}]} {
    %c0 = arith.constant 0 : index
    %c0_0 = arith.constant 0 : index
    %0 = vector.load %arg1[%c0, %c0_0] : memref<8x128xf32, #tpu.memory_space<vmem>>, vector<8x128xf32>
    %1 = arith.truncf %0 : vector<8x128xf32> to vector<8x128xbf16>
    %c0_1 = arith.constant 0 : index
    %c0_2 = arith.constant 0 : index
    %2 = vector.load %arg2[%c0_1, %c0_2] : memref<128x128xf32, #tpu.memory_space<vmem>>, vector<128x128xf32>
    %3 = arith.truncf %2 : vector<128x128xf32> to vector<128x128xbf16>
    %cst = arith.constant dense<0.000000e+00> : vector<8x128xf32>
    %4 = tpu.matmul %1, %3, %cst {dimension_numbers = #tpu.dot_dimension_numbers<[1], [0], [0], [1], [0, 0, 1, 1], [], []>} : vector<8x128xbf16>, vector<128x128xbf16>, vector<8x128xf32> -> vector<8x128xf32>
    %c0_3 = arith.constant 0 : index
    %c0_4 = arith.constant 0 : index
    %5 = vector.load %arg3[%c0_3, %c0_4] : memref<1x128xf32, #tpu.memory_space<vmem>>, vector<1x128xf32>
    %6 = vector.broadcast %5 : vector<1x128xf32> to vector<8x128xf32>
    %7 = arith.addf %4, %6 : vector<8x128xf32>
    %8 = arith.negf %7 : vector<8x128xf32>
    %9 = math.exp %8 : vector<8x128xf32>
    %cst_5 = arith.constant 1.000000e+00 : f32
    %10 = vector.broadcast %cst_5 : f32 to vector<8x128xf32>
    %11 = arith.addf %10, %9 : vector<8x128xf32>
    %12 = arith.divf %10, %11 : vector<8x128xf32>
    %13 = arith.mulf %7, %12 : vector<8x128xf32>
    %14 = arith.truncf %13 : vector<8x128xf32> to vector<8x128xbf16>
    %c0_6 = arith.constant 0 : index
    %c0_7 = arith.constant 0 : index
    %15 = vector.load %arg4[%c0_6, %c0_7] : memref<128x128xf32, #tpu.memory_space<vmem>>, vector<128x128xf32>
    %16 = arith.truncf %15 : vector<128x128xf32> to vector<128x128xbf16>
    %cst_8 = arith.constant dense<0.000000e+00> : vector<8x128xf32>
    %17 = tpu.matmul %14, %16, %cst_8 {dimension_numbers = #tpu.dot_dimension_numbers<[1], [0], [0], [1], [0, 0, 1, 1], [], []>} : vector<8x128xbf16>, vector<128x128xbf16>, vector<8x128xf32> -> vector<8x128xf32>
    %c0_9 = arith.constant 0 : index
    %c0_10 = arith.constant 0 : index
    %18 = vector.load %arg5[%c0_9, %c0_10] : memref<1x128xf32, #tpu.memory_space<vmem>>, vector<1x128xf32>
    %19 = vector.broadcast %18 : vector<1x128xf32> to vector<8x128xf32>
    %20 = arith.addf %17, %19 : vector<8x128xf32>
    %21 = vector.extract_strided_slice %0 {offsets = [0, 0], sizes = [8, 32], strides = [1, 1]} : vector<8x128xf32> to vector<8x32xf32>
    %22 = vector.extract_strided_slice %0 {offsets = [0, 32], sizes = [8, 32], strides = [1, 1]} : vector<8x128xf32> to vector<8x32xf32>
    %23 = vector.extract_strided_slice %0 {offsets = [0, 64], sizes = [8, 32], strides = [1, 1]} : vector<8x128xf32> to vector<8x32xf32>
    %24 = vector.extract_strided_slice %20 {offsets = [0, 0], sizes = [8, 8], strides = [1, 1]} : vector<8x128xf32> to vector<8x8xf32>
    %25 = vector.extract_strided_slice %20 {offsets = [0, 8], sizes = [8, 8], strides = [1, 1]} : vector<8x128xf32> to vector<8x8xf32>
    %26 = vector.extract_strided_slice %20 {offsets = [0, 16], sizes = [8, 8], strides = [1, 1]} : vector<8x128xf32> to vector<8x8xf32>
    %27 = arith.addf %21, %22 : vector<8x32xf32>
    %28 = arith.addf %24, %25 : vector<8x8xf32>
    %29 = arith.addf %27, %23 : vector<8x32xf32>
    %30 = arith.addf %28, %26 : vector<8x8xf32>
    %cst_11 = arith.constant 0.333333343 : f32
    %31 = vector.broadcast %cst_11 : f32 to vector<8x32xf32>
    %32 = arith.mulf %29, %31 : vector<8x32xf32>
    %cst_12 = arith.constant 0.333333343 : f32
    %33 = vector.broadcast %cst_12 : f32 to vector<8x8xf32>
    %34 = arith.mulf %30, %33 : vector<8x8xf32>
    %35 = arith.subf %21, %32 : vector<8x32xf32>
    %36 = arith.mulf %35, %35 : vector<8x32xf32>
    %37 = arith.subf %24, %34 : vector<8x8xf32>
    %38 = arith.mulf %37, %37 : vector<8x8xf32>
    %39 = arith.subf %22, %32 : vector<8x32xf32>
    %40 = arith.mulf %39, %39 : vector<8x32xf32>
    %41 = arith.addf %36, %40 : vector<8x32xf32>
    %42 = arith.subf %25, %34 : vector<8x8xf32>
    %43 = arith.mulf %42, %42 : vector<8x8xf32>
    %44 = arith.addf %38, %43 : vector<8x8xf32>
    %45 = arith.subf %23, %32 : vector<8x32xf32>
    %46 = arith.mulf %45, %45 : vector<8x32xf32>
    %47 = arith.addf %41, %46 : vector<8x32xf32>
    %48 = arith.subf %26, %34 : vector<8x8xf32>
    %49 = arith.mulf %48, %48 : vector<8x8xf32>
    %50 = arith.addf %44, %49 : vector<8x8xf32>
    %cst_13 = arith.constant 5.000000e-01 : f32
    %51 = vector.broadcast %cst_13 : f32 to vector<8x32xf32>
    %52 = arith.mulf %47, %51 : vector<8x32xf32>
    %53 = math.sqrt %52 : vector<8x32xf32>
    %cst_14 = arith.constant 5.000000e-01 : f32
    %54 = vector.broadcast %cst_14 : f32 to vector<8x8xf32>
    %55 = arith.mulf %50, %54 : vector<8x8xf32>
    %56 = math.sqrt %55 : vector<8x8xf32>
    %57 = vector.extract_strided_slice %24 {offsets = [0, 0], sizes = [8, 1], strides = [1, 1]} : vector<8x8xf32> to vector<8x1xf32>
    %58 = vector.extract_strided_slice %24 {offsets = [0, 2], sizes = [8, 1], strides = [1, 1]} : vector<8x8xf32> to vector<8x1xf32>
    %59 = arith.addf %57, %58 : vector<8x1xf32>
    %60 = vector.extract_strided_slice %24 {offsets = [0, 3], sizes = [8, 1], strides = [1, 1]} : vector<8x8xf32> to vector<8x1xf32>
    %61 = arith.addf %59, %60 : vector<8x1xf32>
    %62 = vector.extract_strided_slice %24 {offsets = [0, 4], sizes = [8, 1], strides = [1, 1]} : vector<8x8xf32> to vector<8x1xf32>
    %63 = arith.addf %61, %62 : vector<8x1xf32>
    %64 = vector.extract_strided_slice %25 {offsets = [0, 0], sizes = [8, 1], strides = [1, 1]} : vector<8x8xf32> to vector<8x1xf32>
    %65 = vector.extract_strided_slice %25 {offsets = [0, 2], sizes = [8, 1], strides = [1, 1]} : vector<8x8xf32> to vector<8x1xf32>
    %66 = arith.addf %64, %65 : vector<8x1xf32>
    %67 = vector.extract_strided_slice %25 {offsets = [0, 3], sizes = [8, 1], strides = [1, 1]} : vector<8x8xf32> to vector<8x1xf32>
    %68 = arith.addf %66, %67 : vector<8x1xf32>
    %69 = vector.extract_strided_slice %25 {offsets = [0, 4], sizes = [8, 1], strides = [1, 1]} : vector<8x8xf32> to vector<8x1xf32>
    %70 = arith.addf %68, %69 : vector<8x1xf32>
    %71 = vector.extract_strided_slice %26 {offsets = [0, 0], sizes = [8, 1], strides = [1, 1]} : vector<8x8xf32> to vector<8x1xf32>
    %72 = vector.extract_strided_slice %26 {offsets = [0, 2], sizes = [8, 1], strides = [1, 1]} : vector<8x8xf32> to vector<8x1xf32>
    %73 = arith.addf %71, %72 : vector<8x1xf32>
    %74 = vector.extract_strided_slice %26 {offsets = [0, 3], sizes = [8, 1], strides = [1, 1]} : vector<8x8xf32> to vector<8x1xf32>
    %75 = arith.addf %73, %74 : vector<8x1xf32>
    %76 = vector.extract_strided_slice %26 {offsets = [0, 4], sizes = [8, 1], strides = [1, 1]} : vector<8x8xf32> to vector<8x1xf32>
    %77 = arith.addf %75, %76 : vector<8x1xf32>
    %78 = vector.extract_strided_slice %24 {offsets = [0, 1], sizes = [8, 1], strides = [1, 1]} : vector<8x8xf32> to vector<8x1xf32>
    %79 = vector.extract_strided_slice %25 {offsets = [0, 1], sizes = [8, 1], strides = [1, 1]} : vector<8x8xf32> to vector<8x1xf32>
    %80 = vector.extract_strided_slice %26 {offsets = [0, 1], sizes = [8, 1], strides = [1, 1]} : vector<8x8xf32> to vector<8x1xf32>
    %81 = tpu.concatenate %63, %70, %77, %78, %79, %80 in 1 : vector<8x1xf32>, vector<8x1xf32>, vector<8x1xf32>, vector<8x1xf32>, vector<8x1xf32>, vector<8x1xf32> -> vector<8x6xf32>
    %cst_15 = arith.constant 0.000000e+00 : f32
    %82 = vector.broadcast %cst_15 : f32 to vector<8x128xf32>
    %c0_16 = arith.constant 0 : index
    %c0_17 = arith.constant 0 : index
    %83 = vector.load %arg6[%c0_16, %c0_17] : memref<8x128xf32, #tpu.memory_space<vmem>>, vector<8x128xf32>
    tpu.vector_store %arg6[%c0_16, %c0_17], %82 {strides = array<i32>} : memref<8x128xf32, #tpu.memory_space<vmem>>, vector<8x128xf32>,
    %c0_18 = arith.constant 0 : index
    %c0_19 = arith.constant 0 : index
    %84 = vector.load %arg6[%c0_18, %c0_19] : memref<8x128xf32, #tpu.memory_space<vmem>>, vector<8x32xf32>
    tpu.vector_store %arg6[%c0_18, %c0_19], %32 {strides = array<i32>} : memref<8x128xf32, #tpu.memory_space<vmem>>, vector<8x32xf32>,
    %c0_20 = arith.constant 0 : index
    %c32 = arith.constant 32 : index
    %85 = vector.load %arg6[%c0_20, %c32] : memref<8x128xf32, #tpu.memory_space<vmem>>, vector<8x32xf32>
    tpu.vector_store %arg6[%c0_20, %c32], %53 {strides = array<i32>} : memref<8x128xf32, #tpu.memory_space<vmem>>, vector<8x32xf32>,
    %c0_21 = arith.constant 0 : index
    %c64 = arith.constant 64 : index
    %86 = vector.load %arg6[%c0_21, %c64] : memref<8x128xf32, #tpu.memory_space<vmem>>, vector<8x8xf32>
    tpu.vector_store %arg6[%c0_21, %c64], %34 {strides = array<i32>} : memref<8x128xf32, #tpu.memory_space<vmem>>, vector<8x8xf32>,
    %c0_22 = arith.constant 0 : index
    %c72 = arith.constant 72 : index
    %87 = vector.load %arg6[%c0_22, %c72] : memref<8x128xf32, #tpu.memory_space<vmem>>, vector<8x8xf32>
    tpu.vector_store %arg6[%c0_22, %c72], %56 {strides = array<i32>} : memref<8x128xf32, #tpu.memory_space<vmem>>, vector<8x8xf32>,
    %c0_23 = arith.constant 0 : index
    %c80 = arith.constant 80 : index
    %88 = vector.load %arg6[%c0_23, %c80] : memref<8x128xf32, #tpu.memory_space<vmem>>, vector<8x6xf32>
    tpu.vector_store %arg6[%c0_23, %c80], %81 {strides = array<i32>} : memref<8x128xf32, #tpu.memory_space<vmem>>, vector<8x6xf32>,
    return
  }
  func.func @transform_0(%arg0: i32) -> (i32, i32) {
    %c0_i32 = arith.constant 0 : i32
    %c0_i32_0 = arith.constant 0 : i32
    return %arg0, %c0_i32 : i32, i32
  }
  func.func @transform_1(%arg0: i32) -> (i32, i32) {
    %c0_i32 = arith.constant 0 : i32
    %c0_i32_0 = arith.constant 0 : i32
    %c0_i32_1 = arith.constant 0 : i32
    return %c0_i32, %c0_i32_0 : i32, i32
  }
  func.func @transform_2(%arg0: i32) -> (i32, i32) {
    %c0_i32 = arith.constant 0 : i32
    %c0_i32_0 = arith.constant 0 : i32
    %c0_i32_1 = arith.constant 0 : i32
    return %c0_i32, %c0_i32_0 : i32, i32
  }
  func.func @transform_3(%arg0: i32) -> (i32, i32) {
    %c0_i32 = arith.constant 0 : i32
    %c0_i32_0 = arith.constant 0 : i32
    %c0_i32_1 = arith.constant 0 : i32
    return %c0_i32, %c0_i32_0 : i32, i32
  }
  func.func @transform_4(%arg0: i32) -> (i32, i32) {
    %c0_i32 = arith.constant 0 : i32
    %c0_i32_0 = arith.constant 0 : i32
    %c0_i32_1 = arith.constant 0 : i32
    return %c0_i32, %c0_i32_0 : i32, i32
  }
  func.func @transform_5(%arg0: i32) -> (i32, i32) {
    %c0_i32 = arith.constant 0 : i32
    %c0_i32_0 = arith.constant 0 : i32
    return %arg0, %c0_i32 : i32, i32
  }
}

</mosaic_0001>

<llo_original>
// kernel: spookynet_ensemble_forward.1
$region0: #{spookynet_ensemble_forward.1}
  #allocation0 [shape = 'u32[]', space=smem, size = 0x4, offset = 0x4, fixed_abs, tag = 'smem constant byte address 0x4 - core index']
  #allocation1 [shape = 'u32[144,128]{1,0:T(1,128)}', space=vmem, size = 0x12000, scoped, tag = 'internal scratch']
  %s0 = inlined_call_operand.vmem [shape: f32[8,128], index: 0, kind: input, shape index: {}]
  %s1 = inlined_call_operand.vmem [shape: f32[128,128], index: 1, kind: input, shape index: {}]
  %s2 = inlined_call_operand.vmem [shape: f32[1,128], index: 2, kind: input, shape index: {}]
  %s3 = inlined_call_operand.vmem [shape: f32[128,128], index: 3, kind: input, shape index: {}]
  %s4 = inlined_call_operand.vmem [shape: f32[1,128], index: 4, kind: input, shape index: {}]
  %s5 = inlined_call_operand.vmem [shape: f32[8,128], index: 5, kind: output, shape index: {}]
  %s6 = sld [smem:[#allocation0]]
  $region30: #{spookynet_ensemble_forward.1} parent=0
    _
  %s8 = ssub.s32 1, %s6
  %s9 = scalar_select 0, %s8, %s6
  // Predicated region
  $region2: #{spookynet_ensemble_forward.1} parent=0 // pred_check
    _
  $region3: #{spookynet_ensemble_forward.1} parent=0 // pred_check_branch
    %11 = sbr.rel (0) target = $region5
  $region4: #{spookynet_ensemble_forward.1} parent=0 // pred_region
    _
  $region5: #{spookynet_ensemble_forward.1} parent=0 // pred_fallthru
    _
  // Predicated region
  $region6: #{spookynet_ensemble_forward.1} parent=0 // pred_check
    _
  $region7: #{spookynet_ensemble_forward.1} parent=0 // pred_check_branch
    %13 = sbr.rel (0) target = $region9
  $region8: #{spookynet_ensemble_forward.1} parent=0 // pred_region
    _
  $region9: #{spookynet_ensemble_forward.1} parent=0 // pred_fallthru
    _
  // Predicated region
  $region10: #{spookynet_ensemble_forward.1} parent=0 // pred_check
    _
  $region11: #{spookynet_ensemble_forward.1} parent=0 // pred_check_branch
    %15 = sbr.rel (0) target = $region13
  $region12: #{spookynet_ensemble_forward.1} parent=0 // pred_region
    _
  $region13: #{spookynet_ensemble_forward.1} parent=0 // pred_fallthru
    _
  // Predicated region
  $region14: #{spookynet_ensemble_forward.1} parent=0 // pred_check
    _
  $region15: #{spookynet_ensemble_forward.1} parent=0 // pred_check_branch
    %17 = sbr.rel (0) target = $region17
  $region16: #{spookynet_ensemble_forward.1} parent=0 // pred_region
    _
  $region17: #{spookynet_ensemble_forward.1} parent=0 // pred_fallthru
    _
  // Predicated region
  $region18: #{spookynet_ensemble_forward.1} parent=0 // pred_check
    _
  $region19: #{spookynet_ensemble_forward.1} parent=0 // pred_check_branch
    %19 = sbr.rel (0) target = $region21
  $region20: #{spookynet_ensemble_forward.1} parent=0 // pred_region
    _
  $region21: #{spookynet_ensemble_forward.1} parent=0 // pred_fallthru
    _
  %v21 = vld [vmem:[%s0] sm:$0xff]
  %v22 = vpack.c.bf16 %v21, %v21
  %v23 = vld [vmem:[%s1] sm:$0xff]
  %v24 = vld [vmem:[%s1 + $0x8] sm:$0xff]
  %v25 = vld [vmem:[%s1 + $0x10] sm:$0xff]
  %v26 = vld [vmem:[%s1 + $0x18] sm:$0xff]
  %v27 = vld [vmem:[%s1 + $0x20] sm:$0xff]
  %v28 = vld [vmem:[%s1 + $0x28] sm:$0xff]
  %v29 = vld [vmem:[%s1 + $0x30] sm:$0xff]
  %v30 = vld [vmem:[%s1 + $0x38] sm:$0xff]
  %v31 = vld [vmem:[%s1 + $0x40] sm:$0xff]
  %v32 = vld [vmem:[%s1 + $0x48] sm:$0xff]
  %v33 = vld [vmem:[%s1 + $0x50] sm:$0xff]
  %v34 = vld [vmem:[%s1 + $0x58] sm:$0xff]
  %v35 = vld [vmem:[%s1 + $0x60] sm:$0xff]
  %v36 = vld [vmem:[%s1 + $0x68] sm:$0xff]
  %v37 = vld [vmem:[%s1 + $0x70] sm:$0xff]
  %v38 = vld [vmem:[%s1 + $0x78] sm:$0xff]
  %v39 = vpack.c.bf16 %v24, %v23
  %v40 = vpack.c.bf16 %v26, %v25
  %v41 = vpack.c.bf16 %v28, %v27
  %v42 = vpack.c.bf16 %v30, %v29
  %v43 = vpack.c.bf16 %v32, %v31
  %v44 = vpack.c.bf16 %v34, %v33
  %v45 = vpack.c.bf16 %v36, %v35
  %v46 = vpack.c.bf16 %v38, %v37
  %v47 = vld [vmem:[%s2] sm:$0x1]
  %v49 = vlaneseq
  %v50 = vshrl.u32 %v49, 7
  %v51 = vsub.s32 0, %v50
  %v52 = vrot.slane %v47, %v51
  %54 = vmatprep.subr.bf16.mxu0 0
  %55 = vmatpush1.bf16.msra.mxu0 %v39
  %56 = vmatprep.subr.bf16.mxu0 0
  %57 = vmatpush1.bf16.msra.mxu0 %v40
  %58 = vmatprep.subr.bf16.mxu0 0
  %59 = vmatpush1.bf16.msra.mxu0 %v41
  %60 = vmatprep.subr.bf16.mxu0 0
  %61 = vmatpush1.bf16.msra.mxu0 %v42
  %62 = vmatprep.subr.bf16.mxu0 0
  %63 = vmatpush1.bf16.msra.mxu0 %v43
  %64 = vmatprep.subr.bf16.mxu0 0
  %65 = vmatpush1.bf16.msra.mxu0 %v44
  %66 = vmatprep.subr.bf16.mxu0 0
  %67 = vmatpush1.bf16.msra.mxu0 %v45
  %68 = vmatprep.subr.bf16.mxu0 0
  %69 = vmatpush1.bf16.msra.mxu0 %v46
  %70 = vmatprep.subr.bf16.mxu0 0
  %71 = vmatpush1.bf16.msra.mxu0 0
  %72 = vmatprep.subr.bf16.mxu0 0
  %73 = vmatpush1.bf16.msra.mxu0 0
  %74 = vmatprep.subr.bf16.mxu0 0
  %75 = vmatpush1.bf16.msra.mxu0 0
  %76 = vmatprep.subr.bf16.mxu0 0
  %77 = vmatpush1.bf16.msra.mxu0 0
  %78 = vmatprep.subr.bf16.mxu0 0
  %79 = vmatpush1.bf16.msra.mxu0 0
  %80 = vmatprep.subr.bf16.mxu0 0
  %81 = vmatpush1.bf16.msra.mxu0 0
  %82 = vmatprep.subr.bf16.mxu0 0
  %83 = vmatpush1.bf16.msra.mxu0 0
  %84 = vmatprep.subr.bf16.mxu0 0
  %85 = vmatpush1.bf16.msra.mxu0 0
  %86 = vmatprep.mubr.bf16.mxu0 0
  %87 = vmatmul.mubr.bf16.gmra.mrb[0].mxu0 %v22
  %v88 = vpop.f32.mrb[0].mxu0
  %v89 = vadd.f32 %v52, %v88
  %v90 = vpop.f32.mrb[0].mxu0
  %v91 = vpop.f32.mrb[0].mxu0
  %v92 = vpop.f32.mrb[0].mxu0
  %93 = vdwg.mxu0
  %v94 = vxor.u32 %v89, 2147483648
  %v95 = vmul.f32 %v94, 1.442695
  %v96 = vpow.pop %v95
  %v97 = vadd.f32 %v96, 1.0
  %v98 = vrcp.pop %v97
  %v99 = vmul.f32 1.0, %v98
  %v100 = vmul.f32 %v89, %v99
  %v101 = vpack.c.bf16 %v100, %v100
  %v102 = vld [vmem:[%s3] sm:$0xff]
  %v103 = vld [vmem:[%s3 + $0x8] sm:$0xff]
  %v104 = vld [vmem:[%s3 + $0x10] sm:$0xff]
  %v105 = vld [vmem:[%s3 + $0x18] sm:$0xff]
  %v106 = vld [vmem:[%s3 + $0x20] sm:$0xff]
  %v107 = vld [vmem:[%s3 + $0x28] sm:$0xff]
  %v108 = vld [vmem:[%s3 + $0x30] sm:$0xff]
  %v109 = vld [vmem:[%s3 + $0x38] sm:$0xff]
  %v110 = vld [vmem:[%s3 + $0x40] sm:$0xff]
  %v111 = vld [vmem:[%s3 + $0x48] sm:$0xff]
  %v112 = vld [vmem:[%s3 + $0x50] sm:$0xff]
  %v113 = vld [vmem:[%s3 + $0x58] sm:$0xff]
  %v114 = vld [vmem:[%s3 + $0x60] sm:$0xff]
  %v115 = vld [vmem:[%s3 + $0x68] sm:$0xff]
  %v116 = vld [vmem:[%s3 + $0x70] sm:$0xff]
  %v117 = vld [vmem:[%s3 + $0x78] sm:$0xff]
  %v118 = vpack.c.bf16 %v103, %v102
  %v119 = vpack.c.bf16 %v105, %v104
  %v120 = vpack.c.bf16 %v107, %v106
  %v121 = vpack.c.bf16 %v109, %v108
  %v122 = vpack.c.bf16 %v111, %v110
  %v123 = vpack.c.bf16 %v113, %v112
  %v124 = vpack.c.bf16 %v115, %v114
  %v125 = vpack.c.bf16 %v117, %v116
  %v126 = vld [vmem:[%s4] sm:$0x1]
  %v128 = vlaneseq
  %v129 = vshrl.u32 %v128, 7
  %v130 = vsub.s32 0, %v129
  %v131 = vrot.slane %v126, %v130
  %133 = vmatprep.subr.bf16.mxu0 0
  %134 = vmatpush1.bf16.msra.mxu0 %v118
  %135 = vmatprep.subr.bf16.mxu0 0
  %136 = vmatpush1.bf16.msra.mxu0 %v119
  %137 = vmatprep.subr.bf16.mxu0 0
  %138 = vmatpush1.bf16.msra.mxu0 %v120
  %139 = vmatprep.subr.bf16.mxu0 0
  %140 = vmatpush1.bf16.msra.mxu0 %v121
  %141 = vmatprep.subr.bf16.mxu0 0
  %142 = vmatpush1.bf16.msra.mxu0 %v122
  %143 = vmatprep.subr.bf16.mxu0 0
  %144 = vmatpush1.bf16.msra.mxu0 %v123
  %145 = vmatprep.subr.bf16.mxu0 0
  %146 = vmatpush1.bf16.msra.mxu0 %v124
  %147 = vmatprep.subr.bf16.mxu0 0
  %148 = vmatpush1.bf16.msra.mxu0 %v125
  %149 = vmatprep.subr.bf16.mxu0 0
  %150 = vmatpush1.bf16.msra.mxu0 0
  %151 = vmatprep.subr.bf16.mxu0 0
  %152 = vmatpush1.bf16.msra.mxu0 0
  %153 = vmatprep.subr.bf16.mxu0 0
  %154 = vmatpush1.bf16.msra.mxu0 0
  %155 = vmatprep.subr.bf16.mxu0 0
  %156 = vmatpush1.bf16.msra.mxu0 0
  %157 = vmatprep.subr.bf16.mxu0 0
  %158 = vmatpush1.bf16.msra.mxu0 0
  %159 = vmatprep.subr.bf16.mxu0 0
  %160 = vmatpush1.bf16.msra.mxu0 0
  %161 = vmatprep.subr.bf16.mxu0 0
  %162 = vmatpush1.bf16.msra.mxu0 0
  %163 = vmatprep.subr.bf16.mxu0 0
  %164 = vmatpush1.bf16.msra.mxu0 0
  %165 = vmatprep.mubr.bf16.mxu0 0
  %166 = vmatmul.mubr.bf16.gmra.mrb[0].mxu0 %v101
  %v167 = vpop.f32.mrb[0].mxu0
  %v168 = vadd.f32 %v131, %v167
  %v169 = vpop.f32.mrb[0].mxu0
  %v170 = vpop.f32.mrb[0].mxu0
  %v171 = vpop.f32.mrb[0].mxu0
  %172 = vdwg.mxu0
  %174 = vrot.lane.b32.xlu0 %v21, 96
  %v175 = vpop.permute.xlu0 %174
  %v177 = vadd.f32 %v21, %v175
  %179 = vrot.lane.b32.xlu0 %v168, 120
  %v180 = vpop.permute.xlu0 %179
  %v182 = vadd.f32 %v168, %v180
  %183 = vrot.lane.b32.xlu0 %v21, 64
  %v184 = vpop.permute.xlu0 %183
  %v186 = vadd.f32 %v177, %v184
  %187 = vrot.lane.b32.xlu0 %v168, 112
  %v188 = vpop.permute.xlu0 %187
  %v190 = vadd.f32 %v182, %v188
  %v191 = vmul.f32 %v186, 0.33333334
  %v192 = vmul.f32 %v190, 0.33333334
  %v193 = vsub.f32 %v21, %v191
  %v194 = vmul.f32 %v193, %v193
  %v195 = vsub.f32 %v168, %v192
  %v196 = vmul.f32 %v195, %v195
  %198 = vrot.lane.b32.xlu0 %v191, 32
  %v199 = vpop.permute.xlu0 %198
  %v201 = vsub.f32 %v21, %v199
  %v202 = vmul.f32 %v201, %v201
  %204 = vrot.lane.b32.xlu0 %v202, 96
  %v205 = vpop.permute.xlu0 %204
  %v207 = vadd.f32 %v194, %v205
  %209 = vrot.lane.b32.xlu0 %v192, 8
  %v210 = vpop.permute.xlu0 %209
  %v212 = vsub.f32 %v168, %v210
  %v213 = vmul.f32 %v212, %v212
  %215 = vrot.lane.b32.xlu0 %v213, 120
  %v216 = vpop.permute.xlu0 %215
  %v218 = vadd.f32 %v196, %v216
  %219 = vrot.lane.b32.xlu0 %v191, 64
  %v220 = vpop.permute.xlu0 %219
  %v222 = vsub.f32 %v21, %v220
  %v223 = vmul.f32 %v222, %v222
  %225 = vrot.lane.b32.xlu0 %v223, 64
  %v226 = vpop.permute.xlu0 %225
  %v228 = vadd.f32 %v207, %v226
  %229 = vrot.lane.b32.xlu0 %v192, 16
  %v230 = vpop.permute.xlu0 %229
  %v232 = vsub.f32 %v168, %v230
  %v233 = vmul.f32 %v232, %v232
  %235 = vrot.lane.b32.xlu0 %v233, 112
  %v236 = vpop.permute.xlu0 %235
  %v238 = vadd.f32 %v218, %v236
  %v239 = vmul.f32 %v228, 0.5
  %v240 = vrsqrt.pop %v239
  %v241 = vmul.f32 %v239, %v240
  %vm242 = vcmp.eq.f32.partialorder %v239, inf
  %v243 = vsel %vm242, %v239, %v241
  %vm244 = vcmp.eq.f32.partialorder %v239, 0.0
  %v245 = vand.u32 %v239, 2147483648
  %v246 = vsel %vm244, %v245, %v243
  %v247 = vmul.f32 %v238, 0.5
  %v248 = vrsqrt.pop %v247
  %v249 = vmul.f32 %v247, %v248
  %vm250 = vcmp.eq.f32.partialorder %v247, inf
  %v251 = vsel %vm250, %v247, %v249
  %vm252 = vcmp.eq.f32.partialorder %v247, 0.0
  %v253 = vand.u32 %v247, 2147483648
  %v254 = vsel %vm252, %v253, %v251
  %255 = vrot.lane.b32.xlu0 %v168, 126
  %v256 = vpop.permute.xlu0 %255
  %v258 = vadd.f32 %v168, %v256
  %259 = vrot.lane.b32.xlu0 %v168, 125
  %v260 = vpop.permute.xlu0 %259
  %v262 = vadd.f32 %v258, %v260
  %263 = vrot.lane.b32.xlu0 %v168, 124
  %v264 = vpop.permute.xlu0 %263
  %v266 = vadd.f32 %v262, %v264
  %268 = vrot.lane.b32.xlu0 %v266, 121
  %v269 = vpop.permute.xlu0 %268
  %271 = vrot.lane.b32.xlu0 %v266, 114
  %v272 = vpop.permute.xlu0 %271
  %274 = vrot.lane.b32.xlu0 %v168, 2
  %v275 = vpop.permute.xlu0 %274
  %277 = vrot.lane.b32.xlu0 %v168, 123
  %v278 = vpop.permute.xlu0 %277
  %280 = vrot.lane.b32.xlu0 %v168, 116
  %v281 = vpop.permute.xlu0 %280
  %vm283 = vcmask 7168
  %v284 = vsel %vm283, %v266, %v269
  %vm285 = vcmask 15360
  %v286 = vsel %vm285, %v284, %v272
  %vm287 = vcmask 23552
  %v288 = vsel %vm287, %v286, %v275
  %vm289 = vcmask 31744
  %v290 = vsel %vm289, %v288, %v278
  %vm291 = vcmask 39936
  %v292 = vsel %vm291, %v290, %v281
  %293 = vst [vmem:[%s5] sm:$0xff] 0.0
  %vm294 = vcmask 261120
  %295 = vst.msk [vmem:[%s5] sm:$0xff] %vm294, %v191
  %297 = vrot.lane.b32.xlu0 %v246, 32
  %v298 = vpop.permute.xlu0 %297
  %vm300 = vcmask 523520
  %301 = vst.msk [vmem:[%s5] sm:$0xff] %vm300, %v298
  %302 = vrot.lane.b32.xlu0 %v192, 64
  %v303 = vpop.permute.xlu0 %302
  %vm305 = vcmask 589312
  %306 = vst.msk [vmem:[%s5] sm:$0xff] %vm305, %v303
  %308 = vrot.lane.b32.xlu0 %v254, 72
  %v309 = vpop.permute.xlu0 %308
  %vm311 = vcmask 654912
  %312 = vst.msk [vmem:[%s5] sm:$0xff] %vm311, %v309
  %314 = vrot.lane.b32.xlu0 %v292, 80
  %v315 = vpop.permute.xlu0 %314
  %vm317 = vcmask 704128
  %318 = vst.msk [vmem:[%s5] sm:$0xff] %vm317, %v315
  // Predicated region
  $region22: #{spookynet_ensemble_forward.1} parent=0 // pred_check
    _
  $region23: #{spookynet_ensemble_forward.1} parent=0 // pred_check_branch
    %320 = sbr.rel (0) target = $region25
  $region24: #{spookynet_ensemble_forward.1} parent=0 // pred_region
    _
  $region25: #{spookynet_ensemble_forward.1} parent=0 // pred_fallthru
    _
  // Predicated region
  $region26: #{spookynet_ensemble_forward.1} parent=0 // pred_check
    _
  $region27: #{spookynet_ensemble_forward.1} parent=0 // pred_check_branch
    %322 = sbr.rel (0) target = $region29
  $region28: #{spookynet_ensemble_forward.1} parent=0 // pred_region
    _
  $region29: #{spookynet_ensemble_forward.1} parent=0 // pred_fallthru
    _

</llo_original>
